<compile_context>
chip_gen: v5e
topology: v5e:2x2
jax: 0.10.0
libtpu: 0.0.40
codegen_flags: <defaults>
</compile_context>

<pallas_src>
import functools

import jax
import jax.numpy as jnp
from jax.experimental import pallas as pl
from jax.experimental.pallas import tpu as pltpu

LANE = 128


def _round_up(x, m):
    return (x + m - 1) // m * m


def _pick_row_tile(n):
    # Largest 128-granular row tile that still leaves >= 2 row tiles, so the
    # "parallel" row axis can shard across v7x's 2 TensorCores.  Floor 128.
    for t in (1024, 512, 256, 128):
        if (n + t - 1) // t >= 2:
            return t
    return 128


def _pick_red_tile(n_pad, tile_m, itemsize, a_dbl_budget_bytes):
    # Largest reduction tile that divides n_pad and keeps the A_hat
    # double-buffer inside the budget (long contiguous DMA rows, few steps).
    for t in (2048, 1024, 512, 256, 128):
        if n_pad % t == 0 and 2 * tile_m * t * itemsize <= a_dbl_budget_bytes:
            return t
    return 128


# ----------------------------- Pallas kernels -----------------------------

def xw_kernel(x_ref, w_ref, o_ref):
    # One row tile of XW = X_pad @ W_f, emitted directly in the stage-2 dtype.
    o_ref[...] = jnp.dot(x_ref[...], w_ref[...],
                         preferred_element_type=jnp.float32).astype(o_ref.dtype)


def agg_kernel(a_ref, xw_ref, b_ref, o_ref, *, tile_k, xw_resident):
    # grid = (row tiles i [parallel], reduction tiles k [arbitrary, last]).
    # Output block index is constant in k -> o_ref stays VMEM-resident and is
    # used directly as the f32 accumulator (no scratch).
    k = pl.program_id(1)

    if xw_resident:
        # Whole XW lives in VMEM (constant block index); slice the k-slab.
        start = pl.multiple_of(k * tile_k, tile_k)
        xw = xw_ref[pl.ds(start, tile_k), :]
    else:
        xw = xw_ref[...]

    part = jnp.dot(a_ref[...], xw, preferred_element_type=jnp.float32)

    @pl.when(k == 0)
    def _():
        o_ref[...] = part

    @pl.when(k > 0)
    def _():
        o_ref[...] += part

    @pl.when(k == pl.num_programs(1) - 1)
    def _():
        # Fused bias + ReLU epilogue in f32 on the VPU.
        o_ref[...] = jnp.maximum(o_ref[...] + b_ref[...], 0.0)


# ------------------------------ host wrapper ------------------------------

def build_normalized_adjacency(edge_index, num_nodes):
    """Dense A_hat = D^{-1/2} (A + I) D^{-1/2}, matching PyG gcn_norm.

    Scatter-ADD so duplicate edges contribute multiple times (like GCNConv's
    scatter-add aggregation).  Note: I is added unconditionally, which matches
    PyG's default add_self_loops only when the input has no explicit self-loops.
    """
    src, dst = edge_index[0], edge_index[1]
    a = jnp.zeros((num_nodes, num_nodes), jnp.float32)
    a = a.at[dst, src].add(1.0)                        # edge j -> i lands at [i, j]
    a = a + jnp.eye(num_nodes, dtype=jnp.float32)      # self loops
    deg = jnp.sum(a, axis=1)
    d_inv_sqrt = jnp.where(deg > 0, 1.0 / jnp.sqrt(deg), 0.0)
    return a * d_inv_sqrt[:, None] * d_inv_sqrt[None, :]


def gcn_forward(x, edge_index, w1, b1, w2, b2, *, a_dtype=jnp.bfloat16):
    n, in_feats = x.shape
    out_feats = w1.shape[0]
    itemsize = jnp.dtype(a_dtype).itemsize

    # Fold the two linear layers (exact: no nonlinearity between them).
    w_f = (w1.T @ w2.T).astype(jnp.float32)             # (in_feats, out_feats)
    b_f = (b1 @ w2.T + b2).astype(jnp.float32)          # (out_feats,)

    in_p = _round_up(in_feats, LANE)
    out_p = _round_up(out_feats, LANE)

    # Pick tiles first, then pad N up to a multiple of the row tile.
    tile_m = _pick_row_tile(n)
    n_pad = _round_up(n, tile_m)
    tile_k = _pick_red_tile(n_pad, tile_m, itemsize, 16 * 1024 * 1024)

    a_hat = build_normalized_adjacency(edge_index, n)
    a_pad = jnp.zeros((n_pad, n_pad), jnp.float32).at[:n, :n].set(a_hat)
    a_pad = a_pad.astype(a_dtype)
    x_pad = jnp.zeros((n_pad, in_p), jnp.float32).at[:n, :in_feats].set(x)
    w_pad = jnp.zeros((in_p, out_p), jnp.float32).at[:in_feats, :out_feats].set(w_f)
    b_pad = jnp.zeros((1, out_p), jnp.float32).at[0, :out_feats].set(b_f)

    # 48 MiB scoped VMEM: headroom under v7x's 64 MiB physical, fine on v5e/v6e.
    vmem_limit = 48 * 1024 * 1024

    # Stage 1: XW = X_pad @ W_f, computed once, emitted in a_dtype.
    xw = pl.pallas_call(
        xw_kernel,
        out_shape=jax.ShapeDtypeStruct((n_pad, out_p), a_dtype),
        grid=(n_pad // tile_m,),
        in_specs=[
            pl.BlockSpec((tile_m, in_p), lambda i: (i, 0)),
            pl.BlockSpec((in_p, out_p), lambda i: (0, 0)),
        ],
        out_specs=pl.BlockSpec((tile_m, out_p), lambda i: (i, 0)),
        compiler_params=pltpu.CompilerParams(
            dimension_semantics=("parallel",),
            vmem_limit_bytes=vmem_limit,
        ),
    )(x_pad, w_pad)

    # Stage 2: out = relu(A_hat @ XW + b_f).
    # VMEM budget check: A_hat double-buffer + output double-buffer + XW
    # (count 2x in case Pallas still double-buffers the constant-index block).
    a_dbl = 2 * tile_m * tile_k * itemsize
    out_dbl = 2 * tile_m * out_p * 4
    xw_full = n_pad * out_p * itemsize
    xw_resident = (a_dbl + out_dbl + 2 * xw_full) <= 40 * 1024 * 1024

    if xw_resident:
        # Whole XW resident in VMEM (constant block index -> fetched once).
        xw_spec = pl.BlockSpec((n_pad, out_p), lambda i, k: (0, 0))
    else:
        # Fallback: stream the k-slab of XW per reduction step.
        xw_spec = pl.BlockSpec((tile_k, out_p), lambda i, k: (k, 0))

    out_pad = pl.pallas_call(
        functools.partial(agg_kernel, tile_k=tile_k, xw_resident=xw_resident),
        out_shape=jax.ShapeDtypeStruct((n_pad, out_p), jnp.float32),
        grid=(n_pad // tile_m, n_pad // tile_k),
        in_specs=[
            pl.BlockSpec((tile_m, tile_k), lambda i, k: (i, k)),   # A_hat tile
            xw_spec,                                               # XW (resident or slab)
            pl.BlockSpec((1, out_p), lambda i, k: (0, 0)),         # folded bias
        ],
        out_specs=pl.BlockSpec((tile_m, out_p), lambda i, k: (i, 0)),
        compiler_params=pltpu.CompilerParams(
            dimension_semantics=("parallel", "arbitrary"),
            vmem_limit_bytes=vmem_limit,
        ),
    )(a_pad, xw, b_pad)

    return out_pad[:n, :out_feats]


def reference_forward(x, edge_index, w1, b1, w2, b2):
    """Pure-JAX reference (unfolded, exactly the module's two-layer math)."""
    a_hat = build_normalized_adjacency(edge_index, x.shape[0])
    conv = a_hat @ (x @ w1.T) + b1[None, :]
    return jnp.maximum(conv @ w2.T + b2[None, :], 0.0)


if __name__ == "__main__":
    N = 300          # padded to 512 -> 2 row tiles of 256 (keeps v7x megacore busy)
    E = 600          # number of directed edges
    IN_FEATS = 16
    OUT_FEATS = 32

    key = jax.random.PRNGKey(0)
    kx, ke1, ke2, kw1, kb1, kw2, kb2 = jax.random.split(key, 7)

    x = jax.random.normal(kx, (N, IN_FEATS), dtype=jnp.float32)
    src = jax.random.randint(ke1, (E,), 0, N, dtype=jnp.int32)
    dst = jax.random.randint(ke2, (E,), 0, N, dtype=jnp.int32)
    edge_index = jnp.stack([src, dst], axis=0)  # (2, E)

    # Synthetic parameters with the module's shapes.
    w1 = 0.1 * jax.random.normal(kw1, (OUT_FEATS, IN_FEATS), dtype=jnp.float32)
    b1 = 0.1 * jax.random.normal(kb1, (OUT_FEATS,), dtype=jnp.float32)
    w2 = 0.1 * jax.random.normal(kw2, (OUT_FEATS, OUT_FEATS), dtype=jnp.float32)
    b2 = 0.1 * jax.random.normal(kb2, (OUT_FEATS,), dtype=jnp.float32)

    ref = reference_forward(x, edge_index, w1, b1, w2, b2)

    # f32 path: validates the restructured kernels at tight tolerance.
    out_f32 = jax.block_until_ready(
        gcn_forward(x, edge_index, w1, b1, w2, b2, a_dtype=jnp.float32))
    assert out_f32.shape == (N, OUT_FEATS)
    err_f32 = float(jnp.max(jnp.abs(out_f32 - ref)))
    assert jnp.allclose(out_f32, ref, atol=2e-4, rtol=1e-3), f"f32 max err {err_f32}"

    # bf16 default: halves the dominant A_hat/XW HBM traffic of the
    # bandwidth-bound stage 2; tolerance relaxed for bf16 rounding.
    out_bf16 = jax.block_until_ready(gcn_forward(x, edge_index, w1, b1, w2, b2))
    assert out_bf16.shape == (N, OUT_FEATS)
    err_bf16 = float(jnp.max(jnp.abs(out_bf16 - ref)))
    assert jnp.allclose(out_bf16, ref, atol=3e-2, rtol=3e-2), f"bf16 max err {err_bf16}"

    print("KERNEL_OK")
</pallas_src>

<mosaic_0001>
module attributes {stable_mosaic.version = 11 : i64} {
  func.func @xw_kernel(%arg0: i32, %arg1: memref<256x128xf32, #tpu.memory_space<vmem>>, %arg2: memref<128x128xf32, #tpu.memory_space<vmem>>, %arg3: memref<256x128xf32, #tpu.memory_space<vmem>>) attributes {dimension_semantics = [#tpu.dimension_semantics<parallel>], iteration_bounds = array<i64: 2>, scalar_prefetch = 0 : i64, scratch_operands = 0 : i64, tpu.core_type = #tpu.core_type<tc>, window_params = [{transform_indices = @transform_0, window_bounds = array<i64: 256, 128>}, {pipeline_mode = #tpu.pipeline_mode<synchronous>, transform_indices = @transform_1, window_bounds = array<i64: 128, 128>}, {transform_indices = @transform_2, window_bounds = array<i64: 256, 128>}]} {
    %c0 = arith.constant 0 : index
    %c0_0 = arith.constant 0 : index
    %0 = vector.load %arg1[%c0, %c0_0] : memref<256x128xf32, #tpu.memory_space<vmem>>, vector<256x128xf32>
    %c0_1 = arith.constant 0 : index
    %c0_2 = arith.constant 0 : index
    %1 = vector.load %arg2[%c0_1, %c0_2] : memref<128x128xf32, #tpu.memory_space<vmem>>, vector<128x128xf32>
    %cst = arith.constant dense<0.000000e+00> : vector<256x128xf32>
    %2 = tpu.matmul %0, %1, %cst {dimension_numbers = #tpu.dot_dimension_numbers<[1], [0], [0], [1], [0, 0, 1, 1], [], []>} : vector<256x128xf32>, vector<128x128xf32>, vector<256x128xf32> -> vector<256x128xf32>
    %c0_3 = arith.constant 0 : index
    %c0_4 = arith.constant 0 : index
    %3 = vector.load %arg3[%c0_3, %c0_4] : memref<256x128xf32, #tpu.memory_space<vmem>>, vector<256x128xf32>
    tpu.vector_store %arg3[%c0_3, %c0_4], %2 {strides = array<i32>} : memref<256x128xf32, #tpu.memory_space<vmem>>, vector<256x128xf32>,
    return
  }
  func.func @transform_0(%arg0: i32) -> (i32, i32) {
    %c0_i32 = arith.constant 0 : i32
    %c0_i32_0 = arith.constant 0 : i32
    return %arg0, %c0_i32 : i32, i32
  }
  func.func @transform_1(%arg0: i32) -> (i32, i32) {
    %c0_i32 = arith.constant 0 : i32
    %c0_i32_0 = arith.constant 0 : i32
    %c0_i32_1 = arith.constant 0 : i32
    return %c0_i32, %c0_i32_0 : i32, i32
  }
  func.func @transform_2(%arg0: i32) -> (i32, i32) {
    %c0_i32 = arith.constant 0 : i32
    %c0_i32_0 = arith.constant 0 : i32
    return %arg0, %c0_i32 : i32, i32
  }
}

</mosaic_0001>

<llo_original>
// kernel: tpu_custom_call.1
$region0: #{tpu_custom_call.1}
  #allocation0 [shape = 'u32[]', space=smem, size = 0x4, offset = 0x4, fixed_abs, tag = 'smem constant byte address 0x4 - core index']
  #allocation1 [shape = 'u32[72,128]{1,0:T(1,128)}', space=vmem, size = 0x9000, scoped, tag = 'internal scratch']
  %s0 = inlined_call_operand.hbm [shape: f32[512,128], index: 0, kind: input, shape index: {}]
  %s1 = inlined_call_operand.hbm [shape: f32[128,128], index: 1, kind: input, shape index: {}]
  %s2 = inlined_call_operand.hbm [shape: f32[512,128], index: 2, kind: output, shape index: {}]
  %s3 = sld [smem:[#allocation0]]
  $region49: #{tpu_custom_call.1} parent=0
    _
  %s5 = ssub.s32 1, %s3
  %s6 = scalar_select 0, %s5, %s3
  $region1: #{tpu_custom_call.1} parent=0
    #allocation2 [shape = 'u8[262144]{0}', space=vmem, size = 0x40000, scoped, tag = 'input window, operand 0']
    #allocation3 [shape = 's32[2]{0}', space=sflag, size = 0x8, scoped, tag = 'scoped memory for tpu_custom_call.1']
    #allocation4 [shape = 's32[2]{0}', space=sflag, size = 0x8, scoped, tag = 'scoped memory for tpu_custom_call.1']
    #allocation5 [shape = 'u8[65536]{0}', space=vmem, size = 0x10000, scoped, tag = 'input window, operand 1, single buffered']
    #allocation6 [shape = 's32[1]{0}', space=sflag, size = 0x4, scoped, tag = 'scoped memory for tpu_custom_call.1']
    #allocation7 [shape = 'u8[262144]{0}', space=vmem, size = 0x40000, scoped, tag = 'output window, operand 0']
    %7 = vsyncpa [#allocation3], 0
    %s8 = scalar_lea.sflag [#allocation3], 1
    %9 = vsyncpa %s8, 0
    %10 = vsyncpa [#allocation6], 0
    %11 = vsyncpa [#allocation4], 0
    %s12 = scalar_lea.sflag [#allocation4], 1
    %13 = vsyncpa %s12, 0
    loop: start=0, step=1, limit=4
    $region2: #{tpu_custom_call.1} parent=1 // loop_pre_header
      _
    $region3: #{tpu_custom_call.1} parent=1 // loop_header
      %s15 = sphi 0, %s19
      %p16 = scmp.ge.s32.totalorder %s15, 4
      %s25 = sphi 0, %s27
      %s28 = sphi 0, %s25
      %s29 = sphi 0, %s28
      %s45 = sphi 0, %s29
      %s49 = sphi 0, %s49
      %s51 = sphi 0, %s49
      %s52 = sphi 0, %s51
      %s66 = sphi 0, %s52
      %s72 = sphi 0, %s74
      %s75 = sphi 0, %s72
      %s76 = sphi 0, %s75
      %s92 = sphi 0, %s76
    $region4: #{tpu_custom_call.1} parent=1 // loop_header_branch
      %18 = sbr.rel (%p16) target = $region8
    $region5: #{tpu_custom_call.1} parent=1 // loop_body
      %s20 = ssub.s32 %s15, 1
      %s21 = ssub.s32 %s15, 2
      %s22 = sadd.s32 %s15, 1
      %s23 = ssub.s32 %s15, %s22
      %p24 = scmp.eq.s32.totalorder %s23, 0
      %s26 = sadd.s32 %s25, 1
      %s27 = scalar_select %p24, %s25, %s26
      %p30 = pneg %p24
      %p31 = scmp.eq.s32.totalorder %s15, 1
      %p32 = por %p30, %p31
      %p33 = scmp.ne.s32.totalorder %s25, %s28
      %p34 = scmp.eq.s32.totalorder %s15, 0
      %p35 = por %p33, %p34
      %p36 = scmp.ne.s32.totalorder %s25, %s28
      %p37 = scmp.eq.s32.totalorder %s20, 1
      %p38 = por %p36, %p37
      %p39 = scmp.ne.s32.totalorder %s28, %s29
      %p40 = scmp.eq.s32.totalorder %s20, 0
      %p41 = por %p39, %p40
      %p42 = scmp.ne.s32.totalorder %s28, %s29
      %p43 = scmp.eq.s32.totalorder %s21, 1
      %p44 = por %p42, %p43
      %p46 = scmp.ne.s32.totalorder %s29, %s45
      %p47 = scmp.eq.s32.totalorder %s21, 0
      %p48 = por %p46, %p47
      %s50 = sadd.s32 %s49, 1
      %p53 = scmp.eq.s32.totalorder %s15, 1
      %p54 = scmp.ne.s32.totalorder %s49, %s51
      %p55 = scmp.eq.s32.totalorder %s15, 0
      %p56 = por %p54, %p55
      %p57 = scmp.ne.s32.totalorder %s49, %s51
      %p58 = scmp.eq.s32.totalorder %s20, 1
      %p59 = por %p57, %p58
      %p60 = scmp.ne.s32.totalorder %s51, %s52
      %p61 = scmp.eq.s32.totalorder %s20, 0
      %p62 = por %p60, %p61
      %p63 = scmp.ne.s32.totalorder %s51, %s52
      %p64 = scmp.eq.s32.totalorder %s21, 1
      %p65 = por %p63, %p64
      %p67 = scmp.ne.s32.totalorder %s52, %s66
      %p68 = scmp.eq.s32.totalorder %s21, 0
      %p69 = por %p67, %p68
      %s70 = ssub.s32 %s15, %s22
      %p71 = scmp.eq.s32.totalorder %s70, 0
      %s73 = sadd.s32 %s72, 1
      %s74 = scalar_select %p71, %s72, %s73
      %p77 = pneg %p71
      %p78 = scmp.eq.s32.totalorder %s15, 1
      %p79 = por %p77, %p78
      %p80 = scmp.ne.s32.totalorder %s72, %s75
      %p81 = scmp.eq.s32.totalorder %s15, 0
      %p82 = por %p80, %p81
      %p83 = scmp.ne.s32.totalorder %s72, %s75
      %p84 = scmp.eq.s32.totalorder %s20, 1
      %p85 = por %p83, %p84
      %p86 = scmp.ne.s32.totalorder %s75, %s76
      %p87 = scmp.eq.s32.totalorder %s20, 0
      %p88 = por %p86, %p87
      %p89 = scmp.ne.s32.totalorder %s75, %s76
      %p90 = scmp.eq.s32.totalorder %s21, 1
      %p91 = por %p89, %p90
      %p93 = scmp.ne.s32.totalorder %s76, %s92
      %p94 = scmp.eq.s32.totalorder %s21, 0
      %p95 = por %p93, %p94
      %p96 = scmp.le.s32.totalorder 1, %s15
      %p97 = scmp.lt.s32.totalorder %s15, 3
      %p98 = pnand %p96, %p97
      %p99 = pneg %p98
      // Predicated region
      $region9: #{tpu_custom_call.1} parent=5 // pred_check
        _
      $region10: #{tpu_custom_call.1} parent=5 // pred_check_branch
        %101 = sbr.rel (%p98) target = $region12
      $region11: #{tpu_custom_call.1} parent=5 // pred_region
        %s102 = ssub.s32 %s15, 1
        // Predicated region
        $region13: #{tpu_custom_call.1} parent=11 // pred_check
          %p103 = pneg %p62
        $region14: #{tpu_custom_call.1} parent=11 // pred_check_branch
          %105 = sbr.rel (%p103) target = $region16
        $region15: #{tpu_custom_call.1} parent=11 // pred_region
          %107 = vsyncadd [#allocation6], 0
          %s108 = sshll.u32 %s1, 4
          %s109 = int_to_ptr.hbm [resolvable:$true] %s108
          %s110 = sshll.u32 [#allocation5], 4
          %s111 = int_to_ptr.vmem [resolvable:$true] %s110
          %116 = dma.hbm_to_vmem [thread:$0]  %s109, 2048, %s111, [#allocation6], 128, 128, 8
        $region16: #{tpu_custom_call.1} parent=11 // pred_fallthru
          _
      $region12: #{tpu_custom_call.1} parent=5 // pred_fallthru
        _
      %p117 = scmp.lt.s32.totalorder %s15, 2
      // Predicated region
      $region17: #{tpu_custom_call.1} parent=5 // pred_check
        %p118 = pneg %p117
      $region18: #{tpu_custom_call.1} parent=5 // pred_check_branch
        %120 = sbr.rel (%p118) target = $region20
      $region19: #{tpu_custom_call.1} parent=5 // pred_region
        // Predicated region
        $region21: #{tpu_custom_call.1} parent=19 // pred_check
          %p121 = pneg %p35
        $region22: #{tpu_custom_call.1} parent=19 // pred_check_branch
          %123 = sbr.rel (%p121) target = $region24
        $region23: #{tpu_custom_call.1} parent=19 // pred_region
          %s124 = sand.u32 %s25, 1
          %s125 = scalar_lea.sflag [#allocation3], %s124
          %s126 = sand.u32 %s25, 1
          %s127 = smul.addr %s126, 256
          %s128 = scalar_lea.vmem [#allocation2], %s127
          %s129 = smul.u32 32, %s15
          %131 = vsyncadd %s125, 0
          %s132 = smul.addr %s129, 8
          %s133 = scalar_lea.hbm %s0, %s132
          %s134 = sshll.u32 %s133, 4
          %s135 = int_to_ptr.hbm [resolvable:$true] %s134
          %s136 = sshll.u32 %s128, 4
          %s137 = int_to_ptr.vmem [resolvable:$true] %s136
          %142 = dma.hbm_to_vmem [thread:$0]  %s135, 4096, %s137, %s125, 128, 128, 8
        $region24: #{tpu_custom_call.1} parent=19 // pred_fallthru
          _
      $region20: #{tpu_custom_call.1} parent=5 // pred_fallthru
        _
      %p143 = scmp.le.s32.totalorder 1, %s15
      %p144 = scmp.lt.s32.totalorder %s15, 3
      %p145 = pnand %p143, %p144
      %p146 = pneg %p145
      // Predicated region
      $region25: #{tpu_custom_call.1} parent=5 // pred_check
        _
      $region26: #{tpu_custom_call.1} parent=5 // pred_check_branch
        %148 = sbr.rel (%p145) target = $region28
      $region27: #{tpu_custom_call.1} parent=5 // pred_region
        %s149 = ssub.s32 %s15, 1
        %s150 = sand.u32 %s28, 1
        %s151 = scalar_lea.sflag [#allocation3], %s150
        %s152 = sand.u32 %s28, 1
        %s153 = smul.addr %s152, 256
        %s154 = scalar_lea.vmem [#allocation2], %s153
        // Predicated region
        $region29: #{tpu_custom_call.1} parent=27 // pred_check
          %p155 = pneg %p41
        $region30: #{tpu_custom_call.1} parent=27 // pred_check_branch
          %157 = sbr.rel (%p155) target = $region32
        $region31: #{tpu_custom_call.1} parent=27 // pred_region
          %159 = dma.done %s151, 4096
        $region32: #{tpu_custom_call.1} parent=27 // pred_fallthru
          _
        // Predicated region
        $region33: #{tpu_custom_call.1} parent=27 // pred_check
          %p160 = pneg %p62
        $region34: #{tpu_custom_call.1} parent=27 // pred_check_branch
          %162 = sbr.rel (%p160) target = $region36
        $region35: #{tpu_custom_call.1} parent=27 // pred_region
          %164 = dma.done [#allocation6], 2048
        $region36: #{tpu_custom_call.1} parent=27 // pred_fallthru
          _
        %s165 = sand.u32 %s28, 1
        %s166 = scalar_lea.sflag [#allocation3], %s165
        %s167 = sand.u32 %s28, 1
        %s168 = smul.addr %s167, 256
        %s169 = scalar_lea.vmem [#allocation2], %s168
        %p170 = pneg %p41
        %p171 = pneg %p38
        %p172 = pneg %p62
        %p173 = pneg %p59
        %p174 = pneg %p88
        %p175 = pneg %p85
        %s176 = sand.u32 %s75, 1
        %s177 = scalar_lea.sflag [#allocation4], %s176
        %s178 = sand.u32 %s75, 1
        %s179 = smul.addr %s178, 256
        %s180 = scalar_lea.vmem [#allocation7], %s179
        %s181 = smul.u32 32, %s20
        %s182 = smul.u32 32, %s20
        %v183 = vld [vmem:[%s154] sm:$0xff]
        %v184 = vld [vmem:[%s154 + $0x8] sm:$0xff]
        %v185 = vld [vmem:[%s154 + $0x10] sm:$0xff]
        %v186 = vld [vmem:[%s154 + $0x18] sm:$0xff]
        %v187 = vld [vmem:[%s154 + $0x20] sm:$0xff]
        %v188 = vld [vmem:[%s154 + $0x28] sm:$0xff]
        %v189 = vld [vmem:[%s154 + $0x30] sm:$0xff]
        %v190 = vld [vmem:[%s154 + $0x38] sm:$0xff]
        %v191 = vld [vmem:[%s154 + $0x40] sm:$0xff]
        %v192 = vld [vmem:[%s154 + $0x48] sm:$0xff]
        %v193 = vld [vmem:[%s154 + $0x50] sm:$0xff]
        %v194 = vld [vmem:[%s154 + $0x58] sm:$0xff]
        %v195 = vld [vmem:[%s154 + $0x60] sm:$0xff]
        %v196 = vld [vmem:[%s154 + $0x68] sm:$0xff]
        %v197 = vld [vmem:[%s154 + $0x70] sm:$0xff]
        %v198 = vld [vmem:[%s154 + $0x78] sm:$0xff]
        %v199 = vld [vmem:[%s154 + $0x80] sm:$0xff]
        %v200 = vld [vmem:[%s154 + $0x88] sm:$0xff]
        %v201 = vld [vmem:[%s154 + $0x90] sm:$0xff]
        %v202 = vld [vmem:[%s154 + $0x98] sm:$0xff]
        %v203 = vld [vmem:[%s154 + $0xa0] sm:$0xff]
        %v204 = vld [vmem:[%s154 + $0xa8] sm:$0xff]
        %v205 = vld [vmem:[%s154 + $0xb0] sm:$0xff]
        %v206 = vld [vmem:[%s154 + $0xb8] sm:$0xff]
        %v207 = vld [vmem:[%s154 + $0xc0] sm:$0xff]
        %v208 = vld [vmem:[%s154 + $0xc8] sm:$0xff]
        %v209 = vld [vmem:[%s154 + $0xd0] sm:$0xff]
        %v210 = vld [vmem:[%s154 + $0xd8] sm:$0xff]
        %v211 = vld [vmem:[%s154 + $0xe0] sm:$0xff]
        %v212 = vld [vmem:[%s154 + $0xe8] sm:$0xff]
        %v213 = vld [vmem:[%s154 + $0xf0] sm:$0xff]
        %v214 = vld [vmem:[%s154 + $0xf8] sm:$0xff]
        %v215 = vld [vmem:[#allocation5] sm:$0xff]
        %v216 = vld [vmem:[#allocation5 + $0x8] sm:$0xff]
        %v217 = vld [vmem:[#allocation5 + $0x10] sm:$0xff]
        %v218 = vld [vmem:[#allocation5 + $0x18] sm:$0xff]
        %v219 = vld [vmem:[#allocation5 + $0x20] sm:$0xff]
        %v220 = vld [vmem:[#allocation5 + $0x28] sm:$0xff]
        %v221 = vld [vmem:[#allocation5 + $0x30] sm:$0xff]
        %v222 = vld [vmem:[#allocation5 + $0x38] sm:$0xff]
        %v223 = vld [vmem:[#allocation5 + $0x40] sm:$0xff]
        %v224 = vld [vmem:[#allocation5 + $0x48] sm:$0xff]
        %v225 = vld [vmem:[#allocation5 + $0x50] sm:$0xff]
        %v226 = vld [vmem:[#allocation5 + $0x58] sm:$0xff]
        %v227 = vld [vmem:[#allocation5 + $0x60] sm:$0xff]
        %v228 = vld [vmem:[#allocation5 + $0x68] sm:$0xff]
        %v229 = vld [vmem:[#allocation5 + $0x70] sm:$0xff]
        %v230 = vld [vmem:[#allocation5 + $0x78] sm:$0xff]
        %231 = vmatpush.msra.mxu0 %v230
        %232 = vmatpush.msra.mxu0 %v229
        %233 = vmatpush.msra.mxu0 %v228
        %234 = vmatpush.msra.mxu0 %v227
        %235 = vmatpush.msra.mxu0 %v226
        %236 = vmatpush.msra.mxu0 %v225
        %237 = vmatpush.msra.mxu0 %v224
        %238 = vmatpush.msra.mxu0 %v223
        %239 = vmatpush.msra.mxu0 %v222
        %240 = vmatpush.msra.mxu0 %v221
        %241 = vmatpush.msra.mxu0 %v220
        %242 = vmatpush.msra.mxu0 %v219
        %243 = vmatpush.msra.mxu0 %v218
        %244 = vmatpush.msra.mxu0 %v217
        %245 = vmatpush.msra.mxu0 %v216
        %246 = vmatpush.msra.mxu0 %v215
        %247 = vmatmul.f32.gmra.mxu0 %v183
        %v248 = vpop.f32.mrf.mxu0
        %v249 = vadd.f32 0.0, %v248
        %250 = vmatmul.f32.gmra.mxu0 %v184
        %v251 = vpop.f32.mrf.mxu0
        %v252 = vadd.f32 0.0, %v251
        %253 = vmatmul.f32.gmra.mxu0 %v185
        %v254 = vpop.f32.mrf.mxu0
        %v255 = vadd.f32 0.0, %v254
        %256 = vmatmul.f32.gmra.mxu0 %v186
        %v257 = vpop.f32.mrf.mxu0
        %v258 = vadd.f32 0.0, %v257
        %259 = vmatmul.f32.gmra.mxu0 %v187
        %v260 = vpop.f32.mrf.mxu0
        %v261 = vadd.f32 0.0, %v260
        %262 = vmatmul.f32.gmra.mxu0 %v188
        %v263 = vpop.f32.mrf.mxu0
        %v264 = vadd.f32 0.0, %v263
        %265 = vmatmul.f32.gmra.mxu0 %v189
        %v266 = vpop.f32.mrf.mxu0
        %v267 = vadd.f32 0.0, %v266
        %268 = vmatmul.f32.gmra.mxu0 %v190
        %v269 = vpop.f32.mrf.mxu0
        %v270 = vadd.f32 0.0, %v269
        %271 = vmatmul.f32.gmra.mxu0 %v191
        %v272 = vpop.f32.mrf.mxu0
        %v273 = vadd.f32 0.0, %v272
        %274 = vmatmul.f32.gmra.mxu0 %v192
        %v275 = vpop.f32.mrf.mxu0
        %v276 = vadd.f32 0.0, %v275
        %277 = vmatmul.f32.gmra.mxu0 %v193
        %v278 = vpop.f32.mrf.mxu0
        %v279 = vadd.f32 0.0, %v278
        %280 = vmatmul.f32.gmra.mxu0 %v194
        %v281 = vpop.f32.mrf.mxu0
        %v282 = vadd.f32 0.0, %v281
        %283 = vmatmul.f32.gmra.mxu0 %v195
        %v284 = vpop.f32.mrf.mxu0
        %v285 = vadd.f32 0.0, %v284
        %286 = vmatmul.f32.gmra.mxu0 %v196
        %v287 = vpop.f32.mrf.mxu0
        %v288 = vadd.f32 0.0, %v287
        %289 = vmatmul.f32.gmra.mxu0 %v197
        %v290 = vpop.f32.mrf.mxu0
        %v291 = vadd.f32 0.0, %v290
        %292 = vmatmul.f32.gmra.mxu0 %v198
        %v293 = vpop.f32.mrf.mxu0
        %v294 = vadd.f32 0.0, %v293
        %295 = vmatmul.f32.gmra.mxu0 %v199
        %v296 = vpop.f32.mrf.mxu0
        %v297 = vadd.f32 0.0, %v296
        %298 = vmatmul.f32.gmra.mxu0 %v200
        %v299 = vpop.f32.mrf.mxu0
        %v300 = vadd.f32 0.0, %v299
        %301 = vmatmul.f32.gmra.mxu0 %v201
        %v302 = vpop.f32.mrf.mxu0
        %v303 = vadd.f32 0.0, %v302
        %304 = vmatmul.f32.gmra.mxu0 %v202
        %v305 = vpop.f32.mrf.mxu0
        %v306 = vadd.f32 0.0, %v305
        %307 = vmatmul.f32.gmra.mxu0 %v203
        %v308 = vpop.f32.mrf.mxu0
        %v309 = vadd.f32 0.0, %v308
        %310 = vmatmul.f32.gmra.mxu0 %v204
        %v311 = vpop.f32.mrf.mxu0
        %v312 = vadd.f32 0.0, %v311
        %313 = vmatmul.f32.gmra.mxu0 %v205
        %v314 = vpop.f32.mrf.mxu0
        %v315 = vadd.f32 0.0, %v314
        %316 = vmatmul.f32.gmra.mxu0 %v206
        %v317 = vpop.f32.mrf.mxu0
        %v318 = vadd.f32 0.0, %v317
        %319 = vmatmul.f32.gmra.mxu0 %v207
        %v320 = vpop.f32.mrf.mxu0
        %v321 = vadd.f32 0.0, %v320
        %322 = vmatmul.f32.gmra.mxu0 %v208
        %v323 = vpop.f32.mrf.mxu0
        %v324 = vadd.f32 0.0, %v323
        %325 = vmatmul.f32.gmra.mxu0 %v209
        %v326 = vpop.f32.mrf.mxu0
        %v327 = vadd.f32 0.0, %v326
        %328 = vmatmul.f32.gmra.mxu0 %v210
        %v329 = vpop.f32.mrf.mxu0
        %v330 = vadd.f32 0.0, %v329
        %331 = vmatmul.f32.gmra.mxu0 %v211
        %v332 = vpop.f32.mrf.mxu0
        %v333 = vadd.f32 0.0, %v332
        %334 = vmatmul.f32.gmra.mxu0 %v212
        %v335 = vpop.f32.mrf.mxu0
        %v336 = vadd.f32 0.0, %v335
        %337 = vmatmul.f32.gmra.mxu0 %v213
        %v338 = vpop.f32.mrf.mxu0
        %v339 = vadd.f32 0.0, %v338
        %340 = vmatmul.f32.gmra.mxu0 %v214
        %v341 = vpop.f32.mrf.mxu0
        %v342 = vadd.f32 0.0, %v341
        %343 = vdwg.mxu0
        %344 = vst [vmem:[%s180] sm:$0xff] %v249
        %345 = vst [vmem:[%s180 + $0x8] sm:$0xff] %v252
        %346 = vst [vmem:[%s180 + $0x10] sm:$0xff] %v255
        %347 = vst [vmem:[%s180 + $0x18] sm:$0xff] %v258
        %348 = vst [vmem:[%s180 + $0x20] sm:$0xff] %v261
        %349 = vst [vmem:[%s180 + $0x28] sm:$0xff] %v264
        %350 = vst [vmem:[%s180 + $0x30] sm:$0xff] %v267
        %351 = vst [vmem:[%s180 + $0x38] sm:$0xff] %v270
        %352 = vst [vmem:[%s180 + $0x40] sm:$0xff] %v273
        %353 = vst [vmem:[%s180 + $0x48] sm:$0xff] %v276
        %354 = vst [vmem:[%s180 + $0x50] sm:$0xff] %v279
        %355 = vst [vmem:[%s180 + $0x58] sm:$0xff] %v282
        %356 = vst [vmem:[%s180 + $0x60] sm:$0xff] %v285
        %357 = vst [vmem:[%s180 + $0x68] sm:$0xff] %v288
        %358 = vst [vmem:[%s180 + $0x70] sm:$0xff] %v291
        %359 = vst [vmem:[%s180 + $0x78] sm:$0xff] %v294
        %360 = vst [vmem:[%s180 + $0x80] sm:$0xff] %v297
        %361 = vst [vmem:[%s180 + $0x88] sm:$0xff] %v300
        %362 = vst [vmem:[%s180 + $0x90] sm:$0xff] %v303
        %363 = vst [vmem:[%s180 + $0x98] sm:$0xff] %v306
        %364 = vst [vmem:[%s180 + $0xa0] sm:$0xff] %v309
        %365 = vst [vmem:[%s180 + $0xa8] sm:$0xff] %v312
        %366 = vst [vmem:[%s180 + $0xb0] sm:$0xff] %v315
        %367 = vst [vmem:[%s180 + $0xb8] sm:$0xff] %v318
        %368 = vst [vmem:[%s180 + $0xc0] sm:$0xff] %v321
        %369 = vst [vmem:[%s180 + $0xc8] sm:$0xff] %v324
        %370 = vst [vmem:[%s180 + $0xd0] sm:$0xff] %v327
        %371 = vst [vmem:[%s180 + $0xd8] sm:$0xff] %v330
        %372 = vst [vmem:[%s180 + $0xe0] sm:$0xff] %v333
        %373 = vst [vmem:[%s180 + $0xe8] sm:$0xff] %v336
        %374 = vst [vmem:[%s180 + $0xf0] sm:$0xff] %v339
        %375 = vst [vmem:[%s180 + $0xf8] sm:$0xff] %v342
        %s376 = sand.u32 %s75, 1
        %s377 = scalar_lea.sflag [#allocation4], %s376
        %s378 = sand.u32 %s75, 1
        %s379 = smul.addr %s378, 256
        %s380 = scalar_lea.vmem [#allocation7], %s379
        // Predicated region
        $region37: #{tpu_custom_call.1} parent=27 // pred_check
          %p381 = pneg %p85
        $region38: #{tpu_custom_call.1} parent=27 // pred_check_branch
          %383 = sbr.rel (%p381) target = $region40
        $region39: #{tpu_custom_call.1} parent=27 // pred_region
          %s384 = smul.u32 32, %s20
          %386 = vsyncadd %s377, 0
          %s387 = smul.addr %s384, 8
          %s388 = scalar_lea.hbm %s2, %s387
          %s389 = sshll.u32 %s380, 4
          %s390 = int_to_ptr.vmem [resolvable:$true] %s389
          %s391 = sshll.u32 %s388, 4
          %s392 = int_to_ptr.hbm [resolvable:$true] %s391
          %397 = dma.vmem_to_hbm [thread:$0]  %s390, 4096, %s392, %s377, 128, 128, 8
        $region40: #{tpu_custom_call.1} parent=27 // pred_fallthru
          _
      $region28: #{tpu_custom_call.1} parent=5 // pred_fallthru
        _
      %p398 = scmp.le.s32.totalorder 2, %s15
      // Predicated region
      $region41: #{tpu_custom_call.1} parent=5 // pred_check
        %p399 = pneg %p398
      $region42: #{tpu_custom_call.1} parent=5 // pred_check_branch
        %401 = sbr.rel (%p399) target = $region44
      $region43: #{tpu_custom_call.1} parent=5 // pred_region
        %s402 = ssub.s32 %s15, 2
        // Predicated region
        $region45: #{tpu_custom_call.1} parent=43 // pred_check
          %p403 = pneg %p91
        $region46: #{tpu_custom_call.1} parent=43 // pred_check_branch
          %405 = sbr.rel (%p403) target = $region48
        $region47: #{tpu_custom_call.1} parent=43 // pred_region
          %s406 = sand.u32 %s76, 1
          %s407 = scalar_lea.sflag [#allocation4], %s406
          %s408 = sand.u32 %s76, 1
          %s409 = smul.addr %s408, 256
          %s410 = scalar_lea.vmem [#allocation7], %s409
          %412 = dma.done %s407, 4096
        $region48: #{tpu_custom_call.1} parent=43 // pred_fallthru
          _
      $region44: #{tpu_custom_call.1} parent=5 // pred_fallthru
        _
    $region6: #{tpu_custom_call.1} parent=1 // loop_footer
      %s19 = sadd.s32 1, %s15
    $region7: #{tpu_custom_call.1} parent=1 // loop_footer_branch
      %14 = sbr.rel target = $region3
    $region8: #{tpu_custom_call.1} parent=1 // loop_exit
      _
    %413 = vsyncpa [#allocation3], 1
    %s414 = scalar_lea.sflag [#allocation3], 1
    %415 = vsyncpa %s414, 1
    %416 = vsyncpa [#allocation6], 1
    %417 = vsyncpa [#allocation4], 1
    %s418 = scalar_lea.sflag [#allocation4], 1
    %419 = vsyncpa %s418, 1

</llo_original>
